<compile_context>
chip_gen: v5e
topology: v5e:2x2
jax: 0.10.0
libtpu: 0.0.40
codegen_flags: <defaults>
</compile_context>

<pallas_src>
import jax
import jax.numpy as jnp
from jax.experimental import pallas as pl
from jax.experimental.pallas import tpu as pltpu

ENCODER_DIM = 2048  # hard-coded in the PyTorch module


def _round_up(x, m):
    return ((x + m - 1) // m) * m


# ---------------------------------------------------------------------------
# Kernel 1: LSTM recurrence, grid over time, h/c carried in VMEM scratch.
# ---------------------------------------------------------------------------
def _recurrence_kernel(xproj_ref, whh_ref, h0_ref, c0_ref, hout_ref, h_scr, c_scr):
    t = pl.program_id(0)
    Hp = h_scr.shape[1]

    @pl.when(t == 0)
    def _():
        h_scr[...] = h0_ref[...]
        c_scr[...] = c0_ref[...]

    h = h_scr[...]                       # (Bp, Hp) f32
    c = c_scr[...]                       # (Bp, Hp) f32

    # gates = x @ W_ih^T + b (precomputed, xproj) + h @ W_hh^T   (bf16 MXU, f32 acc)
    gates = xproj_ref[0] + jnp.dot(h.astype(jnp.bfloat16), whh_ref[...],
                                   preferred_element_type=jnp.float32)

    i_g = jax.nn.sigmoid(gates[:, 0:Hp])
    f_g = jax.nn.sigmoid(gates[:, Hp:2 * Hp])
    g_g = jnp.tanh(gates[:, 2 * Hp:3 * Hp])
    o_g = jax.nn.sigmoid(gates[:, 3 * Hp:4 * Hp])

    c_new = f_g * c + i_g * g_g
    h_new = o_g * jnp.tanh(c_new)
    c_scr[...] = c_new
    h_scr[...] = h_new
    hout_ref[0] = h_new


def lstm_recurrence_pallas(xproj_tbg, h0, c0, w_hh_bf16):
    T, Bp, G = xproj_tbg.shape           # G = 4*Hp
    Hp = h0.shape[1]

    resident = (2 * Bp * G * 4           # xproj step slab, double-buffered
                + 2 * Bp * Hp * 4        # h_out step slab, double-buffered
                + 2 * Hp * G * 2         # W_hh bf16 (conservatively x2)
                + 2 * 2 * Bp * Hp * 4    # h0 / c0
                + 2 * Bp * Hp * 4)       # h/c scratch
    vmem_limit = max(int(resident) + (4 << 20), 32 << 20)

    return pl.pallas_call(
        _recurrence_kernel,
        out_shape=jax.ShapeDtypeStruct((T, Bp, Hp), jnp.float32),
        grid=(T,),
        in_specs=[
            pl.BlockSpec((1, Bp, G), lambda t: (t, 0, 0)),   # xproj[t]
            pl.BlockSpec((Hp, G),   lambda t: (0, 0)),        # W_hh (resident)
            pl.BlockSpec((Bp, Hp),  lambda t: (0, 0)),         # h0
            pl.BlockSpec((Bp, Hp),  lambda t: (0, 0)),         # c0
        ],
        out_specs=pl.BlockSpec((1, Bp, Hp), lambda t: (t, 0, 0)),
        scratch_shapes=[pltpu.VMEM((Bp, Hp), jnp.float32),     # h carry
                        pltpu.VMEM((Bp, Hp), jnp.float32)],    # c carry
        compiler_params=pltpu.CompilerParams(
            dimension_semantics=("arbitrary",),
            vmem_limit_bytes=vmem_limit),
    )(xproj_tbg, w_hh_bf16, h0, c0)


# ---------------------------------------------------------------------------
# Kernel 2: hoisted vocab projection (big tiled matmul) + length mask.
# ---------------------------------------------------------------------------
def _fc_kernel(h_ref, mask_ref, w_ref, b_ref, out_ref):
    preds = jnp.dot(h_ref[...].astype(jnp.bfloat16), w_ref[...],
                    preferred_element_type=jnp.float32) + b_ref[...]
    out_ref[...] = jnp.where(mask_ref[...] > 0, preds, 0.0)


def fc_projection_pallas(h_mh, mask_m1, w_fc_bf16, b_fc, tm, tn):
    Mp, Hp = h_mh.shape
    Vp = w_fc_bf16.shape[1]

    resident = (2 * tm * Hp * 4 + 2 * tm * 4
                + 2 * Hp * tn * 2 + 2 * tn * 4
                + 2 * tm * tn * 4)
    vmem_limit = max(int(resident) + (4 << 20), 32 << 20)

    return pl.pallas_call(
        _fc_kernel,
        out_shape=jax.ShapeDtypeStruct((Mp, Vp), jnp.float32),
        grid=(Mp // tm, Vp // tn),
        in_specs=[
            pl.BlockSpec((tm, Hp), lambda i, j: (i, 0)),
            pl.BlockSpec((tm, 1),  lambda i, j: (i, 0)),
            pl.BlockSpec((Hp, tn), lambda i, j: (0, j)),
            pl.BlockSpec((1, tn),  lambda i, j: (0, j)),
        ],
        out_specs=pl.BlockSpec((tm, tn), lambda i, j: (i, j)),
        compiler_params=pltpu.CompilerParams(
            dimension_semantics=("parallel", "parallel"),
            vmem_limit_bytes=vmem_limit),
    )(h_mh, mask_m1, w_fc_bf16, b_fc)


# ---------------------------------------------------------------------------
# Parameter packing: pad per-gate columns to Hp lanes, pad rows, bf16 weights.
# Padded gate columns / rows are zero -> padded hidden units stay exactly 0
# and padded W_fc rows are zero, so padding never leaks into real outputs.
# ---------------------------------------------------------------------------
def _pack_params(params, E, H, V, Ep, Hp, Vp):
    def pad_gate_cols(w):                 # (in, 4H) -> (in, 4Hp), per-gate padding
        blocks = []
        for g in range(4):
            blk = w[:, g * H:(g + 1) * H]
            blocks.append(jnp.pad(blk, ((0, 0), (0, Hp - H))))
        return jnp.concatenate(blocks, axis=1)

    w_ih = jnp.pad(pad_gate_cols(params["w_ih_t"]), ((0, Ep - E), (0, 0)))   # (Ep, 4Hp)
    w_hh = jnp.pad(pad_gate_cols(params["w_hh_t"]), ((0, Hp - H), (0, 0)))   # (Hp, 4Hp)
    b_g = pad_gate_cols(params["b_gates"])                                   # (1, 4Hp)
    w_fc = jnp.pad(params["w_fc_t"], ((0, Hp - H), (0, Vp - V)))             # (Hp, Vp)
    b_fc = jnp.pad(params["b_fc"], ((0, 0), (0, Vp - V)))                    # (1, Vp)
    return w_ih, w_hh, b_g, w_fc, b_fc


# ---------------------------------------------------------------------------
# Full Decoder.forward equivalent (sorting / gather / padding glue in XLA).
# ---------------------------------------------------------------------------
def decoder_forward(params, encoder_out, encoded_captions, caption_lengths):
    cl = caption_lengths.squeeze(1)                 # (B,)
    sort_ind = jnp.argsort(-cl)                     # descending (stable; torch sort isn't)
    cl_sorted = cl[sort_ind]
    enc = encoder_out[sort_ind].astype(jnp.float32)
    caps = encoded_captions[sort_ind]

    embeddings = params["embedding"][caps]          # (B, L, E)
    decode_lengths = cl_sorted - 1
    T = int(jnp.max(decode_lengths))                # concrete (as in PyTorch)

    B, _, E = embeddings.shape
    H = params["w_hh_t"].shape[0]
    V = params["w_fc_t"].shape[1]
    Bp = _round_up(B, 8)
    Ep = _round_up(E, 128)
    Hp = _round_up(H, 128)
    Vp = _round_up(V, 128)

    w_ih, w_hh, b_g, w_fc, b_fc = _pack_params(params, E, H, V, Ep, Hp, Vp)

    # --- init_hidden_state hoisted out of the kernel (used once) ---
    h0 = enc @ params["w_init_h_t"] + params["b_init_h"]
    c0 = enc @ params["w_init_c_t"] + params["b_init_c"]
    h0p = jnp.pad(h0, ((0, Bp - B), (0, Hp - H))).astype(jnp.float32)
    c0p = jnp.pad(c0, ((0, Bp - B), (0, Hp - H))).astype(jnp.float32)

    # --- hoisted input projection: one big (T*B, E) x (E, 4H) matmul ---
    embeds_tbe = jnp.transpose(embeddings[:, :T, :], (1, 0, 2)).astype(jnp.float32)
    embeds_tbe = jnp.pad(embeds_tbe, ((0, 0), (0, Bp - B), (0, Ep - E)))     # (T,Bp,Ep)
    xproj = (embeds_tbe.reshape(T * Bp, Ep) @ w_ih + b_g).reshape(T, Bp, 4 * Hp)

    # --- recurrence: Pallas kernel, grid over T, h/c in VMEM scratch ---
    h_all = lstm_recurrence_pallas(xproj, h0p, c0p,
                                   w_hh.astype(jnp.bfloat16))               # (T,Bp,Hp)

    # --- hoisted vocab projection + length mask, tiled Pallas matmul ---
    # TODO(synk): nn.Dropout(p=0.5) before fc is identity in eval mode;
    # train-mode dropout (pltpu.prng_*) is not implemented.
    M = T * Bp
    TM = 128
    Mp = _round_up(M, TM)
    TN = 512 if Vp % 512 == 0 else (256 if Vp % 256 == 0 else 128)

    mask_tb = (jnp.arange(T)[:, None] < decode_lengths[None, :]).astype(jnp.float32)
    mask_tb = jnp.pad(mask_tb, ((0, 0), (0, Bp - B)))                         # (T,Bp)
    mask_m1 = jnp.pad(mask_tb.reshape(M, 1), ((0, Mp - M), (0, 0)))           # (Mp,1)
    h_mh = jnp.pad(h_all.reshape(M, Hp), ((0, Mp - M), (0, 0)))               # (Mp,Hp)

    preds_mv = fc_projection_pallas(h_mh, mask_m1,
                                    w_fc.astype(jnp.bfloat16), b_fc, TM, TN)  # (Mp,Vp)
    predictions = preds_mv[:M].reshape(T, Bp, Vp)[:, :B, :V]
    predictions = jnp.transpose(predictions, (1, 0, 2))                       # (B,T,V)
    return predictions, caps, decode_lengths, sort_ind


# ---------------------------------------------------------------------------
# Pure-JAX f32 reference (original, unfused, unpadded params) for validation.
# ---------------------------------------------------------------------------
def reference_lstm(embeds_tbe, mask_tb1, enc, params):
    H = params["w_hh_t"].shape[0]
    h = enc @ params["w_init_h_t"] + params["b_init_h"]
    c = enc @ params["w_init_c_t"] + params["b_init_c"]
    outs = []
    for t in range(embeds_tbe.shape[0]):
        x = embeds_tbe[t]
        gates = x @ params["w_ih_t"] + h @ params["w_hh_t"] + params["b_gates"]
        i_g = jax.nn.sigmoid(gates[:, 0:H])
        f_g = jax.nn.sigmoid(gates[:, H:2 * H])
        g_g = jnp.tanh(gates[:, 2 * H:3 * H])
        o_g = jax.nn.sigmoid(gates[:, 3 * H:4 * H])
        c = f_g * c + i_g * g_g
        h = o_g * jnp.tanh(c)
        preds = h @ params["w_fc_t"] + params["b_fc"]
        outs.append(jnp.where(mask_tb1[t] > 0, preds, 0.0))
    return jnp.stack(outs, 0)


if __name__ == "__main__":
    key = jax.random.PRNGKey(0)
    B, L, E, H, V = 4, 9, 32, 32, 64   # batch, max caption len, embed, decoder, vocab
    ks = jax.random.split(key, 12)
    ks_scale = 1.0 / float(jnp.sqrt(jnp.float32(H)))

    params = {
        # nn.Embedding: uniform(-0.1, 0.1)
        "embedding": jax.random.uniform(ks[0], (V, E), jnp.float32, -0.1, 0.1),
        # nn.LSTMCell params (stored transposed: in_features x 4H; gate order i,f,g,o)
        "w_ih_t": jax.random.uniform(ks[1], (E, 4 * H), jnp.float32, -ks_scale, ks_scale),
        "w_hh_t": jax.random.uniform(ks[2], (H, 4 * H), jnp.float32, -ks_scale, ks_scale),
        "b_gates": (jax.random.uniform(ks[3], (1, 4 * H), jnp.float32, -ks_scale, ks_scale)
                    + jax.random.uniform(ks[4], (1, 4 * H), jnp.float32, -ks_scale, ks_scale)),
        # fc: weight uniform(-0.1, 0.1), bias = 0
        "w_fc_t": jax.random.uniform(ks[5], (H, V), jnp.float32, -0.1, 0.1),
        "b_fc": jnp.zeros((1, V), jnp.float32),
        # init_h / init_c Linear(2048, H)
        "w_init_h_t": jax.random.uniform(ks[6], (ENCODER_DIM, H), jnp.float32, -0.02, 0.02),
        "b_init_h": jax.random.uniform(ks[7], (1, H), jnp.float32, -0.02, 0.02),
        "w_init_c_t": jax.random.uniform(ks[8], (ENCODER_DIM, H), jnp.float32, -0.02, 0.02),
        "b_init_c": jax.random.uniform(ks[9], (1, H), jnp.float32, -0.02, 0.02),
    }

    encoder_out = jax.random.normal(ks[10], (B, ENCODER_DIM), jnp.float32)
    encoded_captions = jax.random.randint(ks[11], (B, L), 0, V)
    caption_lengths = jnp.array([[6], [9], [5], [8]], dtype=jnp.int32)

    preds, caps_sorted, dec_lens, sort_ind = decoder_forward(
        params, encoder_out, encoded_captions, caption_lengths)
    preds = jax.block_until_ready(preds)

    # --- validate against pure-JAX f32 reference (unpadded, unfused params) ---
    cl = caption_lengths.squeeze(1)
    si = jnp.argsort(-cl)
    dl = cl[si] - 1
    T = int(jnp.max(dl))
    embeds = params["embedding"][encoded_captions[si]][:, :T, :].astype(jnp.float32)
    embeds_tbe = jnp.transpose(embeds, (1, 0, 2))
    mask = (jnp.arange(T)[:, None] < dl[None, :]).astype(jnp.float32)[:, :, None]
    ref = jnp.transpose(
        reference_lstm(embeds_tbe, mask, encoder_out[si], params), (1, 0, 2))

    assert preds.shape == (B, T, V)
    # bf16 MXU operands -> loosened tolerance vs f32 reference
    max_err = float(jnp.max(jnp.abs(preds - ref)))
    assert jnp.allclose(preds, ref, atol=5e-2, rtol=5e-2), max_err
    print("KERNEL_OK")
</pallas_src>

<mosaic_0001>
module attributes {stable_mosaic.version = 11 : i64} {
  func.func @_recurrence_kernel(%arg0: i32, %arg1: memref<1x8x512xf32, #tpu.memory_space<vmem>>, %arg2: memref<128x512xbf16, #tpu.memory_space<vmem>>, %arg3: memref<8x128xf32, #tpu.memory_space<vmem>>, %arg4: memref<8x128xf32, #tpu.memory_space<vmem>>, %arg5: memref<1x8x128xf32, #tpu.memory_space<vmem>>, %arg6: memref<8x128xf32, #tpu.memory_space<vmem>>, %arg7: memref<8x128xf32, #tpu.memory_space<vmem>>) attributes {dimension_semantics = [#tpu.dimension_semantics<arbitrary>], iteration_bounds = array<i64: 8>, scalar_prefetch = 0 : i64, scratch_operands = 2 : i64, tpu.core_type = #tpu.core_type<tc>, window_params = [{transform_indices = @transform_0, window_bounds = array<i64: 1, 8, 512>}, {pipeline_mode = #tpu.pipeline_mode<synchronous>, transform_indices = @transform_1, window_bounds = array<i64: 128, 512>}, {pipeline_mode = #tpu.pipeline_mode<synchronous>, transform_indices = @transform_2, window_bounds = array<i64: 8, 128>}, {pipeline_mode = #tpu.pipeline_mode<synchronous>, transform_indices = @transform_3, window_bounds = array<i64: 8, 128>}, {transform_indices = @transform_4, window_bounds = array<i64: 1, 8, 128>}]} {
    %c0_i32 = arith.constant 0 : i32
    %0 = arith.cmpi eq, %arg0, %c0_i32 : i32
    %1 = arith.extui %0 : i1 to i32
    %c0_i32_0 = arith.constant 0 : i32
    %2 = arith.cmpi ne, %1, %c0_i32_0 : i32
    scf.if %2 {
      %c0_19 = arith.constant 0 : index
      %c0_20 = arith.constant 0 : index
      %41 = vector.load %arg3[%c0_19, %c0_20] : memref<8x128xf32, #tpu.memory_space<vmem>>, vector<8x128xf32>
      %c0_21 = arith.constant 0 : index
      %c0_22 = arith.constant 0 : index
      %42 = vector.load %arg6[%c0_21, %c0_22] : memref<8x128xf32, #tpu.memory_space<vmem>>, vector<8x128xf32>
      tpu.vector_store %arg6[%c0_21, %c0_22], %41 {strides = array<i32>} : memref<8x128xf32, #tpu.memory_space<vmem>>, vector<8x128xf32>,
      %c0_23 = arith.constant 0 : index
      %c0_24 = arith.constant 0 : index
      %43 = vector.load %arg4[%c0_23, %c0_24] : memref<8x128xf32, #tpu.memory_space<vmem>>, vector<8x128xf32>
      %c0_25 = arith.constant 0 : index
      %c0_26 = arith.constant 0 : index
      %44 = vector.load %arg7[%c0_25, %c0_26] : memref<8x128xf32, #tpu.memory_space<vmem>>, vector<8x128xf32>
      tpu.vector_store %arg7[%c0_25, %c0_26], %43 {strides = array<i32>} : memref<8x128xf32, #tpu.memory_space<vmem>>, vector<8x128xf32>,
    } else {
    }
    %c0 = arith.constant 0 : index
    %c0_1 = arith.constant 0 : index
    %3 = vector.load %arg6[%c0, %c0_1] : memref<8x128xf32, #tpu.memory_space<vmem>>, vector<8x128xf32>
    %c0_2 = arith.constant 0 : index
    %c0_3 = arith.constant 0 : index
    %4 = vector.load %arg7[%c0_2, %c0_3] : memref<8x128xf32, #tpu.memory_space<vmem>>, vector<8x128xf32>
    %c0_4 = arith.constant 0 : index
    %c0_5 = arith.constant 0 : index
    %c0_6 = arith.constant 0 : index
    %5 = vector.load %arg1[%c0_4, %c0_5, %c0_6] : memref<1x8x512xf32, #tpu.memory_space<vmem>>, vector<1x8x512xf32>
    %6 = vector.shape_cast %5 : vector<1x8x512xf32> to vector<8x512xf32>
    %7 = arith.truncf %3 : vector<8x128xf32> to vector<8x128xbf16>
    %c0_7 = arith.constant 0 : index
    %c0_8 = arith.constant 0 : index
    %8 = vector.load %arg2[%c0_7, %c0_8] : memref<128x512xbf16, #tpu.memory_space<vmem>>, vector<128x512xbf16>
    %cst = arith.constant dense<0.000000e+00> : vector<8x512xf32>
    %9 = tpu.matmul %7, %8, %cst {dimension_numbers = #tpu.dot_dimension_numbers<[1], [0], [0], [1], [0, 0, 1, 1], [], []>} : vector<8x128xbf16>, vector<128x512xbf16>, vector<8x512xf32> -> vector<8x512xf32>
    %10 = arith.addf %6, %9 : vector<8x512xf32>
    %11 = vector.extract_strided_slice %10 {offsets = [0, 0], sizes = [8, 128], strides = [1, 1]} : vector<8x512xf32> to vector<8x128xf32>
    %12 = arith.negf %11 : vector<8x128xf32>
    %13 = math.exp %12 : vector<8x128xf32>
    %cst_9 = arith.constant 1.000000e+00 : f32
    %14 = vector.broadcast %cst_9 : f32 to vector<8x128xf32>
    %15 = arith.addf %14, %13 : vector<8x128xf32>
    %16 = arith.divf %14, %15 : vector<8x128xf32>
    %17 = vector.extract_strided_slice %10 {offsets = [0, 128], sizes = [8, 128], strides = [1, 1]} : vector<8x512xf32> to vector<8x128xf32>
    %18 = arith.negf %17 : vector<8x128xf32>
    %19 = math.exp %18 : vector<8x128xf32>
    %cst_10 = arith.constant 1.000000e+00 : f32
    %20 = vector.broadcast %cst_10 : f32 to vector<8x128xf32>
    %21 = arith.addf %20, %19 : vector<8x128xf32>
    %22 = arith.divf %20, %21 : vector<8x128xf32>
    %23 = vector.extract_strided_slice %10 {offsets = [0, 256], sizes = [8, 128], strides = [1, 1]} : vector<8x512xf32> to vector<8x128xf32>
    %24 = math.tanh %23 : vector<8x128xf32>
    %25 = vector.extract_strided_slice %10 {offsets = [0, 384], sizes = [8, 128], strides = [1, 1]} : vector<8x512xf32> to vector<8x128xf32>
    %26 = arith.negf %25 : vector<8x128xf32>
    %27 = math.exp %26 : vector<8x128xf32>
    %cst_11 = arith.constant 1.000000e+00 : f32
    %28 = vector.broadcast %cst_11 : f32 to vector<8x128xf32>
    %29 = arith.addf %28, %27 : vector<8x128xf32>
    %30 = arith.divf %28, %29 : vector<8x128xf32>
    %31 = arith.mulf %22, %4 : vector<8x128xf32>
    %32 = arith.mulf %16, %24 : vector<8x128xf32>
    %33 = arith.addf %31, %32 : vector<8x128xf32>
    %34 = math.tanh %33 : vector<8x128xf32>
    %35 = arith.mulf %30, %34 : vector<8x128xf32>
    %c0_12 = arith.constant 0 : index
    %c0_13 = arith.constant 0 : index
    %36 = vector.load %arg7[%c0_12, %c0_13] : memref<8x128xf32, #tpu.memory_space<vmem>>, vector<8x128xf32>
    tpu.vector_store %arg7[%c0_12, %c0_13], %33 {strides = array<i32>} : memref<8x128xf32, #tpu.memory_space<vmem>>, vector<8x128xf32>,
    %c0_14 = arith.constant 0 : index
    %c0_15 = arith.constant 0 : index
    %37 = vector.load %arg6[%c0_14, %c0_15] : memref<8x128xf32, #tpu.memory_space<vmem>>, vector<8x128xf32>
    tpu.vector_store %arg6[%c0_14, %c0_15], %35 {strides = array<i32>} : memref<8x128xf32, #tpu.memory_space<vmem>>, vector<8x128xf32>,
    %c0_16 = arith.constant 0 : index
    %c0_17 = arith.constant 0 : index
    %c0_18 = arith.constant 0 : index
    %38 = vector.load %arg5[%c0_16, %c0_17, %c0_18] : memref<1x8x128xf32, #tpu.memory_space<vmem>>, vector<1x8x128xf32>
    %39 = vector.shape_cast %38 : vector<1x8x128xf32> to vector<8x128xf32>
    %40 = vector.shape_cast %35 : vector<8x128xf32> to vector<1x8x128xf32>
    tpu.vector_store %arg5[%c0_16, %c0_17, %c0_18], %40 {strides = array<i32>} : memref<1x8x128xf32, #tpu.memory_space<vmem>>, vector<1x8x128xf32>,
    return
  }
  func.func @transform_0(%arg0: i32) -> (i32, i32, i32) {
    %c0_i32 = arith.constant 0 : i32
    %c0_i32_0 = arith.constant 0 : i32
    %c0_i32_1 = arith.constant 0 : i32
    return %arg0, %c0_i32, %c0_i32_0 : i32, i32, i32
  }
  func.func @transform_1(%arg0: i32) -> (i32, i32) {
    %c0_i32 = arith.constant 0 : i32
    %c0_i32_0 = arith.constant 0 : i32
    %c0_i32_1 = arith.constant 0 : i32
    return %c0_i32, %c0_i32_0 : i32, i32
  }
  func.func @transform_2(%arg0: i32) -> (i32, i32) {
    %c0_i32 = arith.constant 0 : i32
    %c0_i32_0 = arith.constant 0 : i32
    %c0_i32_1 = arith.constant 0 : i32
    return %c0_i32, %c0_i32_0 : i32, i32
  }
  func.func @transform_3(%arg0: i32) -> (i32, i32) {
    %c0_i32 = arith.constant 0 : i32
    %c0_i32_0 = arith.constant 0 : i32
    %c0_i32_1 = arith.constant 0 : i32
    return %c0_i32, %c0_i32_0 : i32, i32
  }
  func.func @transform_4(%arg0: i32) -> (i32, i32, i32) {
    %c0_i32 = arith.constant 0 : i32
    %c0_i32_0 = arith.constant 0 : i32
    %c0_i32_1 = arith.constant 0 : i32
    return %arg0, %c0_i32, %c0_i32_0 : i32, i32, i32
  }
}

</mosaic_0001>

<llo_original>
// kernel: tpu_custom_call.1
$region0: #{tpu_custom_call.1}
  #allocation0 [shape = 'u32[]', space=smem, size = 0x4, offset = 0x4, fixed_abs, tag = 'smem constant byte address 0x4 - core index']
  #allocation1 [shape = 'u32[72,128]{1,0:T(1,128)}', space=vmem, size = 0x9000, scoped, tag = 'internal scratch']
  #allocation2 [shape = 'f32[8,128]{1,0:T(8,128)}', space=vmem, size = 0x1000, scoped, tag = 'scratch operand']
  #allocation3 [shape = 'f32[8,128]{1,0:T(8,128)}', space=vmem, size = 0x1000, scoped, tag = 'scratch operand']
  %s0 = inlined_call_operand.hbm [shape: f32[8,8,512], index: 0, kind: input, shape index: {}]
  %s1 = inlined_call_operand.hbm [shape: bf16[128,512], index: 1, kind: input, shape index: {}]
  %s2 = inlined_call_operand.hbm [shape: f32[8,128], index: 2, kind: input, shape index: {}]
  %s3 = inlined_call_operand.hbm [shape: f32[8,128], index: 3, kind: input, shape index: {}]
  %s4 = inlined_call_operand.hbm [shape: f32[8,8,128], index: 4, kind: output, shape index: {}]
  %s5 = sld [smem:[#allocation0]]
  $region69: #{tpu_custom_call.1} parent=0
    _
  %s7 = ssub.s32 1, %s5
  %s8 = scalar_select 0, %s7, %s5
  $region1: #{tpu_custom_call.1} parent=0
    #allocation4 [shape = 'u8[32768]{0}', space=vmem, size = 0x8000, scoped, tag = 'input window, operand 0']
    #allocation5 [shape = 's32[2]{0}', space=sflag, size = 0x8, scoped, tag = 'scoped memory for tpu_custom_call.1']
    #allocation6 [shape = 's32[2]{0}', space=sflag, size = 0x8, scoped, tag = 'scoped memory for tpu_custom_call.1']
    #allocation7 [shape = 'u8[131072]{0}', space=vmem, size = 0x20000, scoped, tag = 'input window, operand 1, single buffered']
    #allocation8 [shape = 's32[1]{0}', space=sflag, size = 0x4, scoped, tag = 'scoped memory for tpu_custom_call.1']
    #allocation9 [shape = 'u8[4096]{0}', space=vmem, size = 0x1000, scoped, tag = 'input window, operand 2, single buffered']
    #allocation10 [shape = 'u8[4096]{0}', space=vmem, size = 0x1000, scoped, tag = 'input window, operand 3, single buffered']
    #allocation11 [shape = 's32[1]{0}', space=sflag, size = 0x4, scoped, tag = 'scoped memory for tpu_custom_call.1']
    #allocation12 [shape = 'u8[8192]{0}', space=vmem, size = 0x2000, scoped, tag = 'output window, operand 0']
    %9 = vsyncpa [#allocation5], 0
    %s10 = scalar_lea.sflag [#allocation5], 1
    %11 = vsyncpa %s10, 0
    %12 = vsyncpa [#allocation8], 0
    %13 = vsyncpa [#allocation11], 0
    %14 = vsyncpa [#allocation6], 0
    %s15 = scalar_lea.sflag [#allocation6], 1
    %16 = vsyncpa %s15, 0
    loop: start=0, step=1, limit=10
    $region2: #{tpu_custom_call.1} parent=1 // loop_pre_header
      _
    $region3: #{tpu_custom_call.1} parent=1 // loop_header
      %s18 = sphi 0, %s22
      %p19 = scmp.ge.s32.totalorder %s18, 10
      %s28 = sphi 0, %s30
      %s31 = sphi 0, %s28
      %s32 = sphi 0, %s31
      %s48 = sphi 0, %s32
      %s52 = sphi 0, %s52
      %s54 = sphi 0, %s52
      %s55 = sphi 0, %s54
      %s69 = sphi 0, %s55
      %s73 = sphi 0, %s73
      %s75 = sphi 0, %s73
      %s76 = sphi 0, %s75
      %s90 = sphi 0, %s76
      %s94 = sphi 0, %s94
      %s96 = sphi 0, %s94
      %s97 = sphi 0, %s96
      %s111 = sphi 0, %s97
      %s117 = sphi 0, %s119
      %s120 = sphi 0, %s117
      %s121 = sphi 0, %s120
      %s137 = sphi 0, %s121
    $region4: #{tpu_custom_call.1} parent=1 // loop_header_branch
      %21 = sbr.rel (%p19) target = $region8
    $region5: #{tpu_custom_call.1} parent=1 // loop_body
      %s23 = ssub.s32 %s18, 1
      %s24 = ssub.s32 %s18, 2
      %s25 = sadd.s32 %s18, 1
      %s26 = ssub.s32 %s18, %s25
      %p27 = scmp.eq.s32.totalorder %s26, 0
      %s29 = sadd.s32 %s28, 1
      %s30 = scalar_select %p27, %s28, %s29
      %p33 = pneg %p27
      %p34 = scmp.eq.s32.totalorder %s18, 7
      %p35 = por %p33, %p34
      %p36 = scmp.ne.s32.totalorder %s28, %s31
      %p37 = scmp.eq.s32.totalorder %s18, 0
      %p38 = por %p36, %p37
      %p39 = scmp.ne.s32.totalorder %s28, %s31
      %p40 = scmp.eq.s32.totalorder %s23, 7
      %p41 = por %p39, %p40
      %p42 = scmp.ne.s32.totalorder %s31, %s32
      %p43 = scmp.eq.s32.totalorder %s23, 0
      %p44 = por %p42, %p43
      %p45 = scmp.ne.s32.totalorder %s31, %s32
      %p46 = scmp.eq.s32.totalorder %s24, 7
      %p47 = por %p45, %p46
      %p49 = scmp.ne.s32.totalorder %s32, %s48
      %p50 = scmp.eq.s32.totalorder %s24, 0
      %p51 = por %p49, %p50
      %s53 = sadd.s32 %s52, 1
      %p56 = scmp.eq.s32.totalorder %s18, 7
      %p57 = scmp.ne.s32.totalorder %s52, %s54
      %p58 = scmp.eq.s32.totalorder %s18, 0
      %p59 = por %p57, %p58
      %p60 = scmp.ne.s32.totalorder %s52, %s54
      %p61 = scmp.eq.s32.totalorder %s23, 7
      %p62 = por %p60, %p61
      %p63 = scmp.ne.s32.totalorder %s54, %s55
      %p64 = scmp.eq.s32.totalorder %s23, 0
      %p65 = por %p63, %p64
      %p66 = scmp.ne.s32.totalorder %s54, %s55
      %p67 = scmp.eq.s32.totalorder %s24, 7
      %p68 = por %p66, %p67
      %p70 = scmp.ne.s32.totalorder %s55, %s69
      %p71 = scmp.eq.s32.totalorder %s24, 0
      %p72 = por %p70, %p71
      %s74 = sadd.s32 %s73, 1
      %p77 = scmp.eq.s32.totalorder %s18, 7
      %p78 = scmp.ne.s32.totalorder %s73, %s75
      %p79 = scmp.eq.s32.totalorder %s18, 0
      %p80 = por %p78, %p79
      %p81 = scmp.ne.s32.totalorder %s73, %s75
      %p82 = scmp.eq.s32.totalorder %s23, 7
      %p83 = por %p81, %p82
      %p84 = scmp.ne.s32.totalorder %s75, %s76
      %p85 = scmp.eq.s32.totalorder %s23, 0
      %p86 = por %p84, %p85
      %p87 = scmp.ne.s32.totalorder %s75, %s76
      %p88 = scmp.eq.s32.totalorder %s24, 7
      %p89 = por %p87, %p88
      %p91 = scmp.ne.s32.totalorder %s76, %s90
      %p92 = scmp.eq.s32.totalorder %s24, 0
      %p93 = por %p91, %p92
      %s95 = sadd.s32 %s94, 1
      %p98 = scmp.eq.s32.totalorder %s18, 7
      %p99 = scmp.ne.s32.totalorder %s94, %s96
      %p100 = scmp.eq.s32.totalorder %s18, 0
      %p101 = por %p99, %p100
      %p102 = scmp.ne.s32.totalorder %s94, %s96
      %p103 = scmp.eq.s32.totalorder %s23, 7
      %p104 = por %p102, %p103
      %p105 = scmp.ne.s32.totalorder %s96, %s97
      %p106 = scmp.eq.s32.totalorder %s23, 0
      %p107 = por %p105, %p106
      %p108 = scmp.ne.s32.totalorder %s96, %s97
      %p109 = scmp.eq.s32.totalorder %s24, 7
      %p110 = por %p108, %p109
      %p112 = scmp.ne.s32.totalorder %s97, %s111
      %p113 = scmp.eq.s32.totalorder %s24, 0
      %p114 = por %p112, %p113
      %s115 = ssub.s32 %s18, %s25
      %p116 = scmp.eq.s32.totalorder %s115, 0
      %s118 = sadd.s32 %s117, 1
      %s119 = scalar_select %p116, %s117, %s118
      %p122 = pneg %p116
      %p123 = scmp.eq.s32.totalorder %s18, 7
      %p124 = por %p122, %p123
      %p125 = scmp.ne.s32.totalorder %s117, %s120
      %p126 = scmp.eq.s32.totalorder %s18, 0
      %p127 = por %p125, %p126
      %p128 = scmp.ne.s32.totalorder %s117, %s120
      %p129 = scmp.eq.s32.totalorder %s23, 7
      %p130 = por %p128, %p129
      %p131 = scmp.ne.s32.totalorder %s120, %s121
      %p132 = scmp.eq.s32.totalorder %s23, 0
      %p133 = por %p131, %p132
      %p134 = scmp.ne.s32.totalorder %s120, %s121
      %p135 = scmp.eq.s32.totalorder %s24, 7
      %p136 = por %p134, %p135
      %p138 = scmp.ne.s32.totalorder %s121, %s137
      %p139 = scmp.eq.s32.totalorder %s24, 0
      %p140 = por %p138, %p139
      %p141 = scmp.le.s32.totalorder 1, %s18
      %p142 = scmp.lt.s32.totalorder %s18, 9
      %p143 = pnand %p141, %p142
      %p144 = pneg %p143
      // Predicated region
      $region9: #{tpu_custom_call.1} parent=5 // pred_check
        _
      $region10: #{tpu_custom_call.1} parent=5 // pred_check_branch
        %146 = sbr.rel (%p143) target = $region12
      $region11: #{tpu_custom_call.1} parent=5 // pred_region
        %s147 = ssub.s32 %s18, 1
        // Predicated region
        $region13: #{tpu_custom_call.1} parent=11 // pred_check
          %p148 = pneg %p65
        $region14: #{tpu_custom_call.1} parent=11 // pred_check_branch
          %150 = sbr.rel (%p148) target = $region16
        $region15: #{tpu_custom_call.1} parent=11 // pred_region
          %152 = vsyncadd [#allocation8], 0
          %s153 = sshll.u32 %s1, 4
          %s154 = int_to_ptr.hbm [resolvable:$true] %s153
          %s155 = sshll.u32 [#allocation7], 4
          %s156 = int_to_ptr.vmem [resolvable:$true] %s155
          %161 = dma.hbm_to_vmem [thread:$0]  %s154, 4096, %s156, [#allocation8], 256, 256, 16
        $region16: #{tpu_custom_call.1} parent=11 // pred_fallthru
          _
        // Predicated region
        $region17: #{tpu_custom_call.1} parent=11 // pred_check
          %p162 = pneg %p86
        $region18: #{tpu_custom_call.1} parent=11 // pred_check_branch
          %164 = sbr.rel (%p162) target = $region20
        $region19: #{tpu_custom_call.1} parent=11 // pred_region
          %166 = vsyncadd [#allocation8], 0
          %s168 = sshll.u32 %s2, 4
          %s169 = int_to_ptr.hbm [resolvable:$true] %s168
          %s170 = sshll.u32 [#allocation9], 4
          %s171 = int_to_ptr.vmem [resolvable:$true] %s170
          %173 = dma.hbm_to_vmem [thread:$0]  %s169, 128, %s171, [#allocation8]
        $region20: #{tpu_custom_call.1} parent=11 // pred_fallthru
          _
        // Predicated region
        $region21: #{tpu_custom_call.1} parent=11 // pred_check
          %p174 = pneg %p107
        $region22: #{tpu_custom_call.1} parent=11 // pred_check_branch
          %176 = sbr.rel (%p174) target = $region24
        $region23: #{tpu_custom_call.1} parent=11 // pred_region
          %178 = vsyncadd [#allocation11], 0
          %s180 = sshll.u32 %s3, 4
          %s181 = int_to_ptr.hbm [resolvable:$true] %s180
          %s182 = sshll.u32 [#allocation10], 4
          %s183 = int_to_ptr.vmem [resolvable:$true] %s182
          %185 = dma.hbm_to_vmem [thread:$0]  %s181, 128, %s183, [#allocation11]
        $region24: #{tpu_custom_call.1} parent=11 // pred_fallthru
          _
      $region12: #{tpu_custom_call.1} parent=5 // pred_fallthru
        _
      %p186 = scmp.lt.s32.totalorder %s18, 8
      // Predicated region
      $region25: #{tpu_custom_call.1} parent=5 // pred_check
        %p187 = pneg %p186
      $region26: #{tpu_custom_call.1} parent=5 // pred_check_branch
        %189 = sbr.rel (%p187) target = $region28
      $region27: #{tpu_custom_call.1} parent=5 // pred_region
        // Predicated region
        $region29: #{tpu_custom_call.1} parent=27 // pred_check
          %p190 = pneg %p38
        $region30: #{tpu_custom_call.1} parent=27 // pred_check_branch
          %192 = sbr.rel (%p190) target = $region32
        $region31: #{tpu_custom_call.1} parent=27 // pred_region
          %s193 = sand.u32 %s28, 1
          %s194 = scalar_lea.sflag [#allocation5], %s193
          %s195 = sand.u32 %s28, 1
          %s196 = smul.addr %s195, 32
          %s197 = scalar_lea.vmem [#allocation4], %s196
          %199 = vsyncadd %s194, 0
          %s200 = smul.addr %s18, 4
          %s201 = smul.addr %s200, 8
          %s202 = scalar_lea.hbm %s0, %s201
          %s204 = sshll.u32 %s202, 4
          %s205 = int_to_ptr.hbm [resolvable:$true] %s204
          %s206 = sshll.u32 %s197, 4
          %s207 = int_to_ptr.vmem [resolvable:$true] %s206
          %209 = dma.hbm_to_vmem [thread:$0]  %s205, 512, %s207, %s194
        $region32: #{tpu_custom_call.1} parent=27 // pred_fallthru
          _
      $region28: #{tpu_custom_call.1} parent=5 // pred_fallthru
        _
      %p210 = scmp.le.s32.totalorder 1, %s18
      %p211 = scmp.lt.s32.totalorder %s18, 9
      %p212 = pnand %p210, %p211
      %p213 = pneg %p212
      // Predicated region
      $region33: #{tpu_custom_call.1} parent=5 // pred_check
        _
      $region34: #{tpu_custom_call.1} parent=5 // pred_check_branch
        %215 = sbr.rel (%p212) target = $region36
      $region35: #{tpu_custom_call.1} parent=5 // pred_region
        %s216 = ssub.s32 %s18, 1
        %s217 = sand.u32 %s31, 1
        %s218 = scalar_lea.sflag [#allocation5], %s217
        %s219 = sand.u32 %s31, 1
        %s220 = smul.addr %s219, 32
        %s221 = scalar_lea.vmem [#allocation4], %s220
        // Predicated region
        $region37: #{tpu_custom_call.1} parent=35 // pred_check
          %p222 = pneg %p44
        $region38: #{tpu_custom_call.1} parent=35 // pred_check_branch
          %224 = sbr.rel (%p222) target = $region40
        $region39: #{tpu_custom_call.1} parent=35 // pred_region
          %226 = dma.done %s218, 512
        $region40: #{tpu_custom_call.1} parent=35 // pred_fallthru
          _
        // Predicated region
        $region41: #{tpu_custom_call.1} parent=35 // pred_check
          %p227 = pneg %p65
        $region42: #{tpu_custom_call.1} parent=35 // pred_check_branch
          %229 = sbr.rel (%p227) target = $region44
        $region43: #{tpu_custom_call.1} parent=35 // pred_region
          %231 = dma.done [#allocation8], 4096
        $region44: #{tpu_custom_call.1} parent=35 // pred_fallthru
          _
        // Predicated region
        $region45: #{tpu_custom_call.1} parent=35 // pred_check
          %p232 = pneg %p86
        $region46: #{tpu_custom_call.1} parent=35 // pred_check_branch
          %234 = sbr.rel (%p232) target = $region48
        $region47: #{tpu_custom_call.1} parent=35 // pred_region
          %236 = dma.done [#allocation8], 128
        $region48: #{tpu_custom_call.1} parent=35 // pred_fallthru
          _
        // Predicated region
        $region49: #{tpu_custom_call.1} parent=35 // pred_check
          %p237 = pneg %p107
        $region50: #{tpu_custom_call.1} parent=35 // pred_check_branch
          %239 = sbr.rel (%p237) target = $region52
        $region51: #{tpu_custom_call.1} parent=35 // pred_region
          %241 = dma.done [#allocation11], 128
        $region52: #{tpu_custom_call.1} parent=35 // pred_fallthru
          _
        %s242 = sand.u32 %s31, 1
        %s243 = scalar_lea.sflag [#allocation5], %s242
        %s244 = sand.u32 %s31, 1
        %s245 = smul.addr %s244, 32
        %s246 = scalar_lea.vmem [#allocation4], %s245
        %p247 = pneg %p44
        %p248 = pneg %p41
        %p249 = pneg %p65
        %p250 = pneg %p62
        %p251 = pneg %p86
        %p252 = pneg %p83
        %p253 = pneg %p107
        %p254 = pneg %p104
        %p255 = pneg %p133
        %p256 = pneg %p130
        %s257 = sand.u32 %s120, 1
        %s258 = scalar_lea.sflag [#allocation6], %s257
        %s259 = sand.u32 %s120, 1
        %s260 = smul.addr %s259, 8
        %s261 = scalar_lea.vmem [#allocation12], %s260
        %p262 = scmp.eq.s32.totalorder %s23, 0
        // Predicated region
        $region53: #{tpu_custom_call.1} parent=35 // pred_check
          %p263 = pneg %p262
        $region54: #{tpu_custom_call.1} parent=35 // pred_check_branch
          %265 = sbr.rel (%p263) target = $region56
        $region55: #{tpu_custom_call.1} parent=35 // pred_region
          %v266 = vld [vmem:[#allocation9] sm:$0xff]
          %267 = vst [vmem:[#allocation2] sm:$0xff] %v266
          %v268 = vld [vmem:[#allocation10] sm:$0xff]
          %269 = vst [vmem:[#allocation3] sm:$0xff] %v268
        $region56: #{tpu_custom_call.1} parent=35 // pred_fallthru
          _
        %v270 = vld [vmem:[#allocation2] sm:$0xff]
        %v271 = vld [vmem:[#allocation3] sm:$0xff]
        %v272 = vld [vmem:[%s221] sm:$0xff]
        %v273 = vld [vmem:[%s221 + $0x8] sm:$0xff]
        %v274 = vld [vmem:[%s221 + $0x10] sm:$0xff]
        %v275 = vld [vmem:[%s221 + $0x18] sm:$0xff]
        %v276 = vpack.c.bf16 %v270, %v270
        %v277 = vld [vmem:[#allocation7] sm:$0xff]
        %v278 = vld [vmem:[#allocation7 + $0x8] sm:$0xff]
        %v279 = vld [vmem:[#allocation7 + $0x10] sm:$0xff]
        %v280 = vld [vmem:[#allocation7 + $0x18] sm:$0xff]
        %v281 = vld [vmem:[#allocation7 + $0x20] sm:$0xff]
        %v282 = vld [vmem:[#allocation7 + $0x28] sm:$0xff]
        %v283 = vld [vmem:[#allocation7 + $0x30] sm:$0xff]
        %v284 = vld [vmem:[#allocation7 + $0x38] sm:$0xff]
        %v285 = vld [vmem:[#allocation7 + $0x40] sm:$0xff]
        %v286 = vld [vmem:[#allocation7 + $0x48] sm:$0xff]
        %v287 = vld [vmem:[#allocation7 + $0x50] sm:$0xff]
        %v288 = vld [vmem:[#allocation7 + $0x58] sm:$0xff]
        %v289 = vld [vmem:[#allocation7 + $0x60] sm:$0xff]
        %v290 = vld [vmem:[#allocation7 + $0x68] sm:$0xff]
        %v291 = vld [vmem:[#allocation7 + $0x70] sm:$0xff]
        %v292 = vld [vmem:[#allocation7 + $0x78] sm:$0xff]
        %v293 = vld [vmem:[#allocation7 + $0x80] sm:$0xff]
        %v294 = vld [vmem:[#allocation7 + $0x88] sm:$0xff]
        %v295 = vld [vmem:[#allocation7 + $0x90] sm:$0xff]
        %v296 = vld [vmem:[#allocation7 + $0x98] sm:$0xff]
        %v297 = vld [vmem:[#allocation7 + $0xa0] sm:$0xff]
        %v298 = vld [vmem:[#allocation7 + $0xa8] sm:$0xff]
        %v299 = vld [vmem:[#allocation7 + $0xb0] sm:$0xff]
        %v300 = vld [vmem:[#allocation7 + $0xb8] sm:$0xff]
        %v301 = vld [vmem:[#allocation7 + $0xc0] sm:$0xff]
        %v302 = vld [vmem:[#allocation7 + $0xc8] sm:$0xff]
        %v303 = vld [vmem:[#allocation7 + $0xd0] sm:$0xff]
        %v304 = vld [vmem:[#allocation7 + $0xd8] sm:$0xff]
        %v305 = vld [vmem:[#allocation7 + $0xe0] sm:$0xff]
        %v306 = vld [vmem:[#allocation7 + $0xe8] sm:$0xff]
        %v307 = vld [vmem:[#allocation7 + $0xf0] sm:$0xff]
        %v308 = vld [vmem:[#allocation7 + $0xf8] sm:$0xff]
        %v341 = vunpack.c.l.b16 %v277
        %v342 = vunpack.c.h.b16 %v277
        %v343 = vunpack.c.l.b16 %v278
        %v344 = vunpack.c.h.b16 %v278
        %v345 = vunpack.c.l.b16 %v279
        %v346 = vunpack.c.h.b16 %v279
        %v347 = vunpack.c.l.b16 %v280
        %v348 = vunpack.c.h.b16 %v280
        %v349 = vunpack.c.l.b16 %v281
        %v350 = vunpack.c.h.b16 %v281
        %v351 = vunpack.c.l.b16 %v282
        %v352 = vunpack.c.h.b16 %v282
        %v353 = vunpack.c.l.b16 %v283
        %v354 = vunpack.c.h.b16 %v283
        %v355 = vunpack.c.l.b16 %v284
        %v356 = vunpack.c.h.b16 %v284
        %v357 = vunpack.c.l.b16 %v285
        %v358 = vunpack.c.h.b16 %v285
        %v359 = vunpack.c.l.b16 %v286
        %v360 = vunpack.c.h.b16 %v286
        %v361 = vunpack.c.l.b16 %v287
        %v362 = vunpack.c.h.b16 %v287
        %v363 = vunpack.c.l.b16 %v288
        %v364 = vunpack.c.h.b16 %v288
        %v365 = vunpack.c.l.b16 %v289
        %v366 = vunpack.c.h.b16 %v289
        %v367 = vunpack.c.l.b16 %v290
        %v368 = vunpack.c.h.b16 %v290
        %v369 = vunpack.c.l.b16 %v291
        %v370 = vunpack.c.h.b16 %v291
        %v371 = vunpack.c.l.b16 %v292
        %v372 = vunpack.c.h.b16 %v292
        %v373 = vunpack.c.l.b16 %v293
        %v374 = vunpack.c.h.b16 %v293
        %v375 = vunpack.c.l.b16 %v294
        %v376 = vunpack.c.h.b16 %v294
        %v377 = vunpack.c.l.b16 %v295
        %v378 = vunpack.c.h.b16 %v295
        %v379 = vunpack.c.l.b16 %v296
        %v380 = vunpack.c.h.b16 %v296
        %v381 = vunpack.c.l.b16 %v297
        %v382 = vunpack.c.h.b16 %v297
        %v383 = vunpack.c.l.b16 %v298
        %v384 = vunpack.c.h.b16 %v298
        %v385 = vunpack.c.l.b16 %v299
        %v386 = vunpack.c.h.b16 %v299
        %v387 = vunpack.c.l.b16 %v300
        %v388 = vunpack.c.h.b16 %v300
        %v389 = vunpack.c.l.b16 %v301
        %v390 = vunpack.c.h.b16 %v301
        %v391 = vunpack.c.l.b16 %v302
        %v392 = vunpack.c.h.b16 %v302
        %v393 = vunpack.c.l.b16 %v303
        %v394 = vunpack.c.h.b16 %v303
        %v395 = vunpack.c.l.b16 %v304
        %v396 = vunpack.c.h.b16 %v304
        %v397 = vunpack.c.l.b16 %v305
        %v398 = vunpack.c.h.b16 %v305
        %v399 = vunpack.c.l.b16 %v306
        %v400 = vunpack.c.h.b16 %v306
        %v401 = vunpack.c.l.b16 %v307
        %v402 = vunpack.c.h.b16 %v307
        %v403 = vunpack.c.l.b16 %v308
        %v404 = vunpack.c.h.b16 %v308
        %v405 = vpack.c.b16 %v345, %v341
        %v406 = vpack.c.b16 %v346, %v342
        %v407 = vpack.c.b16 %v347, %v343
        %v408 = vpack.c.b16 %v348, %v344
        %v409 = vpack.c.b16 %v353, %v349
        %v410 = vpack.c.b16 %v354, %v350
        %v411 = vpack.c.b16 %v355, %v351
        %v412 = vpack.c.b16 %v356, %v352
        %v413 = vpack.c.b16 %v361, %v357
        %v414 = vpack.c.b16 %v362, %v358
        %v415 = vpack.c.b16 %v363, %v359
        %v416 = vpack.c.b16 %v364, %v360
        %v417 = vpack.c.b16 %v369, %v365
        %v418 = vpack.c.b16 %v370, %v366
        %v419 = vpack.c.b16 %v371, %v367
        %v420 = vpack.c.b16 %v372, %v368
        %v421 = vpack.c.b16 %v377, %v373
        %v422 = vpack.c.b16 %v378, %v374
        %v423 = vpack.c.b16 %v379, %v375
        %v424 = vpack.c.b16 %v380, %v376
        %v425 = vpack.c.b16 %v385, %v381
        %v426 = vpack.c.b16 %v386, %v382
        %v427 = vpack.c.b16 %v387, %v383
        %v428 = vpack.c.b16 %v388, %v384
        %v429 = vpack.c.b16 %v393, %v389
        %v430 = vpack.c.b16 %v394, %v390
        %v431 = vpack.c.b16 %v395, %v391
        %v432 = vpack.c.b16 %v396, %v392
        %v433 = vpack.c.b16 %v401, %v397
        %v434 = vpack.c.b16 %v402, %v398
        %v435 = vpack.c.b16 %v403, %v399
        %v436 = vpack.c.b16 %v404, %v400
        %469 = vmatpush.bf16.msra.mxu0 %v433
        %470 = vmatpush.bf16.msra.mxu0 %v429
        %471 = vmatpush.bf16.msra.mxu0 %v425
        %472 = vmatpush.bf16.msra.mxu0 %v421
        %473 = vmatpush.bf16.msra.mxu0 %v417
        %474 = vmatpush.bf16.msra.mxu0 %v413
        %475 = vmatpush.bf16.msra.mxu0 %v409
        %476 = vmatpush.bf16.msra.mxu0 %v405
        %477 = vmatmul.bf16.gmra.mxu0 %v276
        %v478 = vpop.f32.mrf.mxu0
        %v479 = vadd.f32 0.0, %v478
        %v480 = vpop.f32.mrf.mxu0
        %481 = vdwg.mxu0
        %482 = vmatpush.bf16.msra.mxu0 %v434
        %483 = vmatpush.bf16.msra.mxu0 %v430
        %484 = vmatpush.bf16.msra.mxu0 %v426
        %485 = vmatpush.bf16.msra.mxu0 %v422
        %486 = vmatpush.bf16.msra.mxu0 %v418
        %487 = vmatpush.bf16.msra.mxu0 %v414
        %488 = vmatpush.bf16.msra.mxu0 %v410
        %489 = vmatpush.bf16.msra.mxu0 %v406
        %490 = vmatmul.bf16.gmra.mxu0 %v276
        %v491 = vpop.f32.mrf.mxu0
        %v492 = vadd.f32 0.0, %v491
        %v493 = vpop.f32.mrf.mxu0
        %494 = vdwg.mxu0
        %495 = vmatpush.bf16.msra.mxu0 %v435
        %496 = vmatpush.bf16.msra.mxu0 %v431
        %497 = vmatpush.bf16.msra.mxu0 %v427
        %498 = vmatpush.bf16.msra.mxu0 %v423
        %499 = vmatpush.bf16.msra.mxu0 %v419
        %500 = vmatpush.bf16.msra.mxu0 %v415
        %501 = vmatpush.bf16.msra.mxu0 %v411
        %502 = vmatpush.bf16.msra.mxu0 %v407
        %503 = vmatmul.bf16.gmra.mxu0 %v276
        %v504 = vpop.f32.mrf.mxu0
        %v505 = vadd.f32 0.0, %v504
        %v506 = vpop.f32.mrf.mxu0
        %507 = vdwg.mxu0
        %508 = vmatpush.bf16.msra.mxu0 %v436
        %509 = vmatpush.bf16.msra.mxu0 %v432
        %510 = vmatpush.bf16.msra.mxu0 %v428
        %511 = vmatpush.bf16.msra.mxu0 %v424
        %512 = vmatpush.bf16.msra.mxu0 %v420
        %513 = vmatpush.bf16.msra.mxu0 %v416
        %514 = vmatpush.bf16.msra.mxu0 %v412
        %515 = vmatpush.bf16.msra.mxu0 %v408
        %516 = vmatmul.bf16.gmra.mxu0 %v276
        %v517 = vpop.f32.mrf.mxu0
        %v518 = vadd.f32 0.0, %v517
        %v519 = vpop.f32.mrf.mxu0
        %520 = vdwg.mxu0
        %v521 = vadd.f32 %v272, %v479
        %v522 = vadd.f32 %v273, %v492
        %v523 = vadd.f32 %v274, %v505
        %v524 = vadd.f32 %v275, %v518
        %v525 = vxor.u32 %v521, 2147483648
        %v526 = vmul.f32 %v525, 1.442695
        %v527 = vpow.pop %v526
        %v528 = vadd.f32 %v527, 1.0
        %v529 = vrcp.pop %v528
        %v530 = vmul.f32 %v528, %v529
        %v531 = vsub.f32 1.0, %v530
        %v532 = vmul.f32 %v529, %v531
        %v533 = vadd.f32 %v529, %v532
        %vm534 = vweird.f32 %v528
        %vm535 = vweird.f32 %v529
        %vm536 = vmor %vm534, %vm535
        %v537 = vsel %vm536, %v529, %v533
        %v538 = vand.u32 2147483647, %v528
        %vm539 = vcmp.eq.f32.partialorder %v538, 8.507059e+37
        %v540 = vand.u32 %v528, 2147483648
        %v541 = vor.u32 1.1754944e-38, %v540
        %v542 = vsel %vm539, %v541, %v537
        %v543 = vmul.f32 1.0, %v542
        %v544 = vxor.u32 %v522, 2147483648
        %v545 = vmul.f32 %v544, 1.442695
        %v546 = vpow.pop %v545
        %v547 = vadd.f32 %v546, 1.0
        %v548 = vrcp.pop %v547
        %v549 = vmul.f32 %v547, %v548
        %v550 = vsub.f32 1.0, %v549
        %v551 = vmul.f32 %v548, %v550
        %v552 = vadd.f32 %v548, %v551
        %vm553 = vweird.f32 %v547
        %vm554 = vweird.f32 %v548
        %vm555 = vmor %vm553, %vm554
        %v556 = vsel %vm555, %v548, %v552
        %v557 = vand.u32 2147483647, %v547
        %vm558 = vcmp.eq.f32.partialorder %v557, 8.507059e+37
        %v559 = vand.u32 %v547, 2147483648
        %v560 = vor.u32 1.1754944e-38, %v559
        %v561 = vsel %vm558, %v560, %v556
        %v562 = vmul.f32 1.0, %v561
        %v563 = vtanh.pop %v523
        %v564 = vxor.u32 %v524, 2147483648
        %v565 = vmul.f32 %v564, 1.442695
        %v566 = vpow.pop %v565
        %v567 = vadd.f32 %v566, 1.0
        %v568 = vrcp.pop %v567
        %v569 = vmul.f32 %v567, %v568
        %v570 = vsub.f32 1.0, %v569
        %v571 = vmul.f32 %v568, %v570
        %v572 = vadd.f32 %v568, %v571
        %vm573 = vweird.f32 %v567
        %vm574 = vweird.f32 %v568
        %vm575 = vmor %vm573, %vm574
        %v576 = vsel %vm575, %v568, %v572
        %v577 = vand.u32 2147483647, %v567
        %vm578 = vcmp.eq.f32.partialorder %v577, 8.507059e+37
        %v579 = vand.u32 %v567, 2147483648
        %v580 = vor.u32 1.1754944e-38, %v579
        %v581 = vsel %vm578, %v580, %v576
        %v582 = vmul.f32 1.0, %v581
        %v583 = vmul.f32 %v562, %v271
        %v584 = vmul.f32 %v543, %v563
        %v585 = vadd.f32 %v583, %v584
        %v586 = vtanh.pop %v585
        %v587 = vmul.f32 %v582, %v586
        %588 = vst [vmem:[#allocation3] sm:$0xff] %v585
        %589 = vst [vmem:[#allocation2] sm:$0xff] %v587
        %590 = vst [vmem:[%s261] sm:$0xff] %v587
        %s591 = sand.u32 %s120, 1
        %s592 = scalar_lea.sflag [#allocation6], %s591
        %s593 = sand.u32 %s120, 1
        %s594 = smul.addr %s593, 8
        %s595 = scalar_lea.vmem [#allocation12], %s594
        // Predicated region
        $region57: #{tpu_custom_call.1} parent=35 // pred_check
          %p596 = pneg %p130
        $region58: #{tpu_custom_call.1} parent=35 // pred_check_branch
          %598 = sbr.rel (%p596) target = $region60
        $region59: #{tpu_custom_call.1} parent=35 // pred_region
          %600 = vsyncadd %s592, 0
          %s601 = smul.addr %s23, 8
          %s602 = scalar_lea.hbm %s4, %s601
          %s604 = sshll.u32 %s595, 4
          %s605 = int_to_ptr.vmem [resolvable:$true] %s604
          %s606 = sshll.u32 %s602, 4
          %s607 = int_to_ptr.hbm [resolvable:$true] %s606
          %609 = dma.vmem_to_hbm [thread:$0]  %s605, 128, %s607, %s592
        $region60: #{tpu_custom_call.1} parent=35 // pred_fallthru
          _
      $region36: #{tpu_custom_call.1} parent=5 // pred_fallthru
        _
      %p610 = scmp.le.s32.totalorder 2, %s18
      // Predicated region
      $region61: #{tpu_custom_call.1} parent=5 // pred_check
        %p611 = pneg %p610
      $region62: #{tpu_custom_call.1} parent=5 // pred_check_branch
        %613 = sbr.rel (%p611) target = $region64
      $region63: #{tpu_custom_call.1} parent=5 // pred_region
        %s614 = ssub.s32 %s18, 2
        // Predicated region
        $region65: #{tpu_custom_call.1} parent=63 // pred_check
          %p615 = pneg %p136
        $region66: #{tpu_custom_call.1} parent=63 // pred_check_branch
          %617 = sbr.rel (%p615) target = $region68
        $region67: #{tpu_custom_call.1} parent=63 // pred_region
          %s618 = sand.u32 %s121, 1
          %s619 = scalar_lea.sflag [#allocation6], %s618
          %s620 = sand.u32 %s121, 1
          %s621 = smul.addr %s620, 8
          %s622 = scalar_lea.vmem [#allocation12], %s621
          %624 = dma.done %s619, 128
        $region68: #{tpu_custom_call.1} parent=63 // pred_fallthru
          _
      $region64: #{tpu_custom_call.1} parent=5 // pred_fallthru
        _
    $region6: #{tpu_custom_call.1} parent=1 // loop_footer
      %s22 = sadd.s32 1, %s18
    $region7: #{tpu_custom_call.1} parent=1 // loop_footer_branch
      %17 = sbr.rel target = $region3
    $region8: #{tpu_custom_call.1} parent=1 // loop_exit
      _
    %625 = vsyncpa [#allocation5], 1
    %s626 = scalar_lea.sflag [#allocation5], 1
    %627 = vsyncpa %s626, 1
    %628 = vsyncpa [#allocation8], 1
    %629 = vsyncpa [#allocation11], 1
    %630 = vsyncpa [#allocation6], 1
    %s631 = scalar_lea.sflag [#allocation6], 1
    %632 = vsyncpa %s631, 1

</llo_original>
